<compile_context>
chip_gen: v5e
topology: v5e:2x2
jax: 0.10.0
libtpu: 0.0.40
codegen_flags: <defaults>
</compile_context>

<pallas_src>
import functools

import jax
import jax.numpy as jnp
import numpy as np
from jax.experimental import pallas as pl
from jax.experimental.pallas import tpu as pltpu


# ----------------------------- Pallas kernels ------------------------------

def conv_stats_kernel(x_ref, w_ref, sum_ref, sq_ref):
    # x_ref: (Cin, tp) f32 pixel block; w_ref: (Cconv, Cin) bf16.
    # sum_ref / sq_ref: (Cconv, 8) per-block partials (value replicated along the 8 lanes).
    x = x_ref[...].astype(jnp.bfloat16)
    y = jnp.dot(w_ref[...], x, preferred_element_type=jnp.float32)     # (Cconv, tp) f32
    s = jnp.sum(y, axis=1, keepdims=True)                              # (Cconv, 1)
    q = jnp.sum(y * y, axis=1, keepdims=True)
    sum_ref[...] = jnp.broadcast_to(s, sum_ref.shape)
    sq_ref[...] = jnp.broadcast_to(q, sq_ref.shape)


def conv_bn_hswish_kernel(x_ref, w_ref, scale_ref, bias_ref, o_ref):
    # Recompute the 1x1 conv (MXU is idle under the memory roofline), then fused BN affine
    # + Hardswish. scale/bias are per conv-channel, (Cconv, 1), broadcast along lanes.
    x = x_ref[...].astype(jnp.bfloat16)
    y = jnp.dot(w_ref[...], x, preferred_element_type=jnp.float32)     # (Cconv, tp) f32
    z = y * scale_ref[...] + bias_ref[...]
    o_ref[...] = (z * jnp.clip(z + 3.0, 0.0, 6.0) * (1.0 / 6.0)).astype(o_ref.dtype)


# ------------------------------ pallas_call wrappers ------------------------

def _round_up(a, b):
    return ((a + b - 1) // b) * b


def _pixel_tile(hwp, cin, cconv, max_tile=2048):
    # Largest multiple-of-128 pixel tile that divides hwp and keeps the double-buffered
    # blocks (f32 x, bf16 out, plus f32 y temporaries) comfortably inside the default
    # scoped-VMEM budget on every generation (v5e 16 MiB default is the tightest).
    per_px = 2 * 4 * cin + 2 * 2 * cconv + 4 * cconv
    cap = max(128, min(max_tile, (8 << 20) // per_px))
    n = hwp // 128
    best = 1
    for d in range(1, n + 1):
        if n % d == 0 and 128 * d <= cap:
            best = d
    return 128 * best


def conv_stats(x3, w_bf, *, tp):
    N, Cin, HWp = x3.shape
    Cconv = w_bf.shape[0]
    nj = HWp // tp
    nblk = N * nj
    return pl.pallas_call(
        conv_stats_kernel,
        out_shape=(
            jax.ShapeDtypeStruct((nblk, Cconv, 8), jnp.float32),   # per-block channel sums
            jax.ShapeDtypeStruct((nblk, Cconv, 8), jnp.float32),   # per-block channel sumsq
        ),
        grid=(N, nj),
        in_specs=[
            pl.BlockSpec((None, Cin, tp), lambda n, j: (n, 0, j)),
            pl.BlockSpec((Cconv, Cin), lambda n, j: (0, 0)),       # weight stays resident
        ],
        out_specs=(
            pl.BlockSpec((None, Cconv, 8), lambda n, j: (n * nj + j, 0, 0)),
            pl.BlockSpec((None, Cconv, 8), lambda n, j: (n * nj + j, 0, 0)),
        ),
        compiler_params=pltpu.CompilerParams(
            dimension_semantics=("parallel", "parallel")),
    )(x3, w_bf)


def conv_bn_hswish(x3, w_bf, scale_c, bias_c, *, tp):
    N, Cin, HWp = x3.shape
    Cconv = w_bf.shape[0]
    nj = HWp // tp
    return pl.pallas_call(
        conv_bn_hswish_kernel,
        out_shape=jax.ShapeDtypeStruct((N, Cconv, HWp), jnp.bfloat16),  # bf16 intermediate
        grid=(N, nj),
        in_specs=[
            pl.BlockSpec((None, Cin, tp), lambda n, j: (n, 0, j)),
            pl.BlockSpec((Cconv, Cin), lambda n, j: (0, 0)),
            pl.BlockSpec((Cconv, 1), lambda n, j: (0, 0)),
            pl.BlockSpec((Cconv, 1), lambda n, j: (0, 0)),
        ],
        out_specs=pl.BlockSpec((None, Cconv, tp), lambda n, j: (n, 0, j)),
        compiler_params=pltpu.CompilerParams(
            dimension_semantics=("parallel", "parallel")),
    )(x3, w_bf, scale_c, bias_c)


# ------------------------------ full forward --------------------------------

def pixel_shuffle_block(x_nchw, w_oi, gamma, beta, *, upscale_factor=2, eps=1e-5):
    """Matches PixelShuffleBlock.forward on NCHW input. Returns NCHW float32 output."""
    N, Cin, H, W = x_nchw.shape
    r = upscale_factor
    Cconv = w_oi.shape[0]
    Cout = Cconv // (r * r)
    HW = H * W

    # Pixel tiling: HW already a multiple of 128 (typical) needs no copy of x at all;
    # otherwise pad the pixel axis once (zero pixels contribute nothing to the BN sums).
    HWp = _round_up(HW, 128)
    tp = _pixel_tile(HWp, Cin, Cconv)
    x3 = x_nchw.reshape(N, Cin, HW)                    # free reshape, no data movement
    if HWp != HW:
        x3 = jnp.pad(x3, ((0, 0), (0, 0), (0, HWp - HW)))

    w_bf = w_oi.astype(jnp.bfloat16)                   # (Cconv, Cin), tiny

    # Pass 1: per-block, per-conv-channel sum / sum-of-squares (conv recomputed in pass 2).
    psum, psq = conv_stats(x3, w_bf, tp=tp)

    # Tiny wrapper-side reductions: blocks -> conv channels -> BN (out) channels.
    sum_conv = psum.sum(axis=(0, 2)) * 0.125           # lanes were 8x-replicated
    sq_conv = psq.sum(axis=(0, 2)) * 0.125
    sum_out = sum_conv.reshape(Cout, r * r).sum(axis=1)
    sq_out = sq_conv.reshape(Cout, r * r).sum(axis=1)

    cnt = jnp.float32(N * HW * r * r)                  # elements per BN channel
    mean = sum_out / cnt
    var = jnp.maximum(sq_out / cnt - mean * mean, 0.0)  # biased (training-mode) var, clamped
    scale_out = gamma * jax.lax.rsqrt(var + eps)
    bias_out = beta - mean * scale_out

    # Expand BN affine to conv channels (pixel shuffle groups r*r conv chans per BN chan).
    scale_c = jnp.repeat(scale_out, r * r).reshape(Cconv, 1).astype(jnp.float32)
    bias_c = jnp.repeat(bias_out, r * r).reshape(Cconv, 1).astype(jnp.float32)

    # Pass 2: recompute conv + BN affine + Hardswish, store lane-dense bf16 intermediate.
    y = conv_bn_hswish(x3, w_bf, scale_c, bias_c, tp=tp)

    # Single XLA layout pass: drop pixel padding, pixel-shuffle, emit NCHW f32.
    # (Unavoidable copy given the NCHW output contract; XLA fuses it with the f32 cast.)
    if HWp != HW:
        y = y[:, :, :HW]
    y = y.reshape(N, Cout, r, r, H, W)
    out = jnp.transpose(y, (0, 1, 4, 2, 5, 3)).reshape(N, Cout, H * r, W * r)
    return out.astype(jnp.float32)


# ------------------------------ pure-JAX reference ---------------------------

def reference(x, w, gamma, beta, r, eps=1e-5):
    y = jnp.einsum("nchw,oc->nohw", x, w)
    N, C, H, W = y.shape
    Cout = C // (r * r)
    y = y.reshape(N, Cout, r, r, H, W)
    y = jnp.transpose(y, (0, 1, 4, 2, 5, 3)).reshape(N, Cout, H * r, W * r)
    mean = y.mean(axis=(0, 2, 3), keepdims=True)
    var = ((y - mean) ** 2).mean(axis=(0, 2, 3), keepdims=True)
    z = (y - mean) / jnp.sqrt(var + eps) * gamma.reshape(1, -1, 1, 1) + beta.reshape(1, -1, 1, 1)
    return z * jnp.clip(z + 3.0, 0.0, 6.0) / 6.0


# ----------------------------------- main ------------------------------------

if __name__ == "__main__":
    key = jax.random.PRNGKey(0)
    N, Cin, H, W = 2, 16, 16, 16
    out_c, r = 8, 2
    Cconv = out_c * r * r

    k1, k2, k3, k4 = jax.random.split(key, 4)
    x = jax.random.normal(k1, (N, Cin, H, W), dtype=jnp.float32)
    # Conv2d(in_c, out_c*r^2, 1, bias=False) weight: (Cconv, Cin, 1, 1) -> (Cconv, Cin)
    w = jax.random.normal(k2, (Cconv, Cin), dtype=jnp.float32) / np.sqrt(Cin)
    # BatchNorm2d(out_c) affine params (deterministic, non-trivial)
    gamma = 1.0 + 0.1 * jax.random.normal(k3, (out_c,), dtype=jnp.float32)
    beta = 0.1 * jax.random.normal(k4, (out_c,), dtype=jnp.float32)

    fwd = jax.jit(functools.partial(pixel_shuffle_block, upscale_factor=r))
    out = jax.block_until_ready(fwd(x, w, gamma, beta))
    assert out.shape == (N, out_c, H * r, W * r), out.shape

    # Tolerance reflects the bf16 matmul operands + bf16 intermediate store (per the
    # performance review); BN statistics themselves are accumulated in f32.
    ref = reference(x, w, gamma, beta, r)
    np.testing.assert_allclose(np.asarray(out), np.asarray(ref), rtol=5e-2, atol=5e-2)

    print("KERNEL_OK")
</pallas_src>

<mosaic_0001>
module attributes {stable_mosaic.version = 11 : i64} {
  func.func @conv_stats_kernel(%arg0: i32, %arg1: i32, %arg2: memref<1x16x256xf32, #tpu.memory_space<vmem>>, %arg3: memref<32x16xbf16, #tpu.memory_space<vmem>>, %arg4: memref<1x32x8xf32, #tpu.memory_space<vmem>>, %arg5: memref<1x32x8xf32, #tpu.memory_space<vmem>>) attributes {dimension_semantics = [#tpu.dimension_semantics<parallel>, #tpu.dimension_semantics<parallel>], iteration_bounds = array<i64: 2, 1>, scalar_prefetch = 0 : i64, scratch_operands = 0 : i64, tpu.core_type = #tpu.core_type<tc>, window_params = [{transform_indices = @transform_0, window_bounds = array<i64: 1, 16, 256>}, {pipeline_mode = #tpu.pipeline_mode<synchronous>, transform_indices = @transform_1, window_bounds = array<i64: 32, 16>}, {transform_indices = @transform_2, window_bounds = array<i64: 1, 32, 8>}, {transform_indices = @transform_3, window_bounds = array<i64: 1, 32, 8>}]} {
    %c0 = arith.constant 0 : index
    %c0_0 = arith.constant 0 : index
    %c0_1 = arith.constant 0 : index
    %0 = vector.load %arg2[%c0, %c0_0, %c0_1] : memref<1x16x256xf32, #tpu.memory_space<vmem>>, vector<1x16x256xf32>
    %1 = vector.shape_cast %0 : vector<1x16x256xf32> to vector<16x256xf32>
    %2 = arith.truncf %1 : vector<16x256xf32> to vector<16x256xbf16>
    %c0_2 = arith.constant 0 : index
    %c0_3 = arith.constant 0 : index
    %3 = vector.load %arg3[%c0_2, %c0_3] : memref<32x16xbf16, #tpu.memory_space<vmem>>, vector<32x16xbf16>
    %cst = arith.constant dense<0.000000e+00> : vector<32x256xf32>
    %4 = tpu.matmul %3, %2, %cst {dimension_numbers = #tpu.dot_dimension_numbers<[1], [0], [0], [1], [0, 0, 1, 1], [], []>} : vector<32x16xbf16>, vector<16x256xbf16>, vector<32x256xf32> -> vector<32x256xf32>
    %cst_4 = arith.constant dense<0.000000e+00> : vector<32xf32>
    %5 = vector.multi_reduction <add>, %4, %cst_4 [1] : vector<32x256xf32> to vector<32xf32>
    %6 = vector.shape_cast %5 : vector<32xf32> to vector<32x1xf32>
    %7 = arith.mulf %4, %4 : vector<32x256xf32>
    %cst_5 = arith.constant dense<0.000000e+00> : vector<32xf32>
    %8 = vector.multi_reduction <add>, %7, %cst_5 [1] : vector<32x256xf32> to vector<32xf32>
    %9 = vector.shape_cast %8 : vector<32xf32> to vector<32x1xf32>
    %10 = vector.shape_cast %6 : vector<32x1xf32> to vector<32x1xf32>
    %11 = vector.broadcast %10 : vector<32x1xf32> to vector<32x8xf32>
    %c0_6 = arith.constant 0 : index
    %c0_7 = arith.constant 0 : index
    %c0_8 = arith.constant 0 : index
    %12 = vector.load %arg4[%c0_6, %c0_7, %c0_8] : memref<1x32x8xf32, #tpu.memory_space<vmem>>, vector<1x32x8xf32>
    %13 = vector.shape_cast %12 : vector<1x32x8xf32> to vector<32x8xf32>
    %14 = vector.shape_cast %11 : vector<32x8xf32> to vector<1x32x8xf32>
    tpu.vector_store %arg4[%c0_6, %c0_7, %c0_8], %14 {strides = array<i32>} : memref<1x32x8xf32, #tpu.memory_space<vmem>>, vector<1x32x8xf32>,
    %15 = vector.shape_cast %9 : vector<32x1xf32> to vector<32x1xf32>
    %16 = vector.broadcast %15 : vector<32x1xf32> to vector<32x8xf32>
    %c0_9 = arith.constant 0 : index
    %c0_10 = arith.constant 0 : index
    %c0_11 = arith.constant 0 : index
    %17 = vector.load %arg5[%c0_9, %c0_10, %c0_11] : memref<1x32x8xf32, #tpu.memory_space<vmem>>, vector<1x32x8xf32>
    %18 = vector.shape_cast %17 : vector<1x32x8xf32> to vector<32x8xf32>
    %19 = vector.shape_cast %16 : vector<32x8xf32> to vector<1x32x8xf32>
    tpu.vector_store %arg5[%c0_9, %c0_10, %c0_11], %19 {strides = array<i32>} : memref<1x32x8xf32, #tpu.memory_space<vmem>>, vector<1x32x8xf32>,
    return
  }
  func.func @transform_0(%arg0: i32, %arg1: i32) -> (i32, i32, i32) {
    %c0_i32 = arith.constant 0 : i32
    %c0_i32_0 = arith.constant 0 : i32
    return %arg0, %c0_i32, %arg1 : i32, i32, i32
  }
  func.func @transform_1(%arg0: i32, %arg1: i32) -> (i32, i32) {
    %c0_i32 = arith.constant 0 : i32
    %c0_i32_0 = arith.constant 0 : i32
    %c0_i32_1 = arith.constant 0 : i32
    return %c0_i32, %c0_i32_0 : i32, i32
  }
  func.func @transform_2(%arg0: i32, %arg1: i32) -> (i32, i32, i32) {
    %c1_i32 = arith.constant 1 : i32
    %0 = arith.muli %arg0, %c1_i32 : i32
    %1 = arith.addi %0, %arg1 : i32
    %c0_i32 = arith.constant 0 : i32
    %c0_i32_0 = arith.constant 0 : i32
    %c0_i32_1 = arith.constant 0 : i32
    return %1, %c0_i32, %c0_i32_0 : i32, i32, i32
  }
  func.func @transform_3(%arg0: i32, %arg1: i32) -> (i32, i32, i32) {
    %c1_i32 = arith.constant 1 : i32
    %0 = arith.muli %arg0, %c1_i32 : i32
    %1 = arith.addi %0, %arg1 : i32
    %c0_i32 = arith.constant 0 : i32
    %c0_i32_0 = arith.constant 0 : i32
    %c0_i32_1 = arith.constant 0 : i32
    return %1, %c0_i32, %c0_i32_0 : i32, i32, i32
  }
}

module attributes {stable_mosaic.version = 11 : i64} {
  func.func @conv_bn_hswish_kernel(%arg0: i32, %arg1: i32, %arg2: memref<1x16x256xf32, #tpu.memory_space<vmem>>, %arg3: memref<32x16xbf16, #tpu.memory_space<vmem>>, %arg4: memref<32x1xf32, #tpu.memory_space<vmem>>, %arg5: memref<32x1xf32, #tpu.memory_space<vmem>>, %arg6: memref<1x32x256xbf16, #tpu.memory_space<vmem>>) attributes {dimension_semantics = [#tpu.dimension_semantics<parallel>, #tpu.dimension_semantics<parallel>], iteration_bounds = array<i64: 2, 1>, scalar_prefetch = 0 : i64, scratch_operands = 0 : i64, tpu.core_type = #tpu.core_type<tc>, window_params = [{transform_indices = @transform_0, window_bounds = array<i64: 1, 16, 256>}, {pipeline_mode = #tpu.pipeline_mode<synchronous>, transform_indices = @transform_1, window_bounds = array<i64: 32, 16>}, {pipeline_mode = #tpu.pipeline_mode<synchronous>, transform_indices = @transform_2, window_bounds = array<i64: 32, 1>}, {pipeline_mode = #tpu.pipeline_mode<synchronous>, transform_indices = @transform_3, window_bounds = array<i64: 32, 1>}, {transform_indices = @transform_4, window_bounds = array<i64: 1, 32, 256>}]} {
    %c0 = arith.constant 0 : index
    %c0_0 = arith.constant 0 : index
    %c0_1 = arith.constant 0 : index
    %0 = vector.load %arg2[%c0, %c0_0, %c0_1] : memref<1x16x256xf32, #tpu.memory_space<vmem>>, vector<1x16x256xf32>
    %1 = vector.shape_cast %0 : vector<1x16x256xf32> to vector<16x256xf32>
    %2 = arith.truncf %1 : vector<16x256xf32> to vector<16x256xbf16>
    %c0_2 = arith.constant 0 : index
    %c0_3 = arith.constant 0 : index
    %3 = vector.load %arg3[%c0_2, %c0_3] : memref<32x16xbf16, #tpu.memory_space<vmem>>, vector<32x16xbf16>
    %cst = arith.constant dense<0.000000e+00> : vector<32x256xf32>
    %4 = tpu.matmul %3, %2, %cst {dimension_numbers = #tpu.dot_dimension_numbers<[1], [0], [0], [1], [0, 0, 1, 1], [], []>} : vector<32x16xbf16>, vector<16x256xbf16>, vector<32x256xf32> -> vector<32x256xf32>
    %c0_4 = arith.constant 0 : index
    %c0_5 = arith.constant 0 : index
    %5 = vector.load %arg4[%c0_4, %c0_5] : memref<32x1xf32, #tpu.memory_space<vmem>>, vector<32x1xf32>
    %6 = vector.broadcast %5 : vector<32x1xf32> to vector<32x256xf32>
    %7 = arith.mulf %4, %6 : vector<32x256xf32>
    %c0_6 = arith.constant 0 : index
    %c0_7 = arith.constant 0 : index
    %8 = vector.load %arg5[%c0_6, %c0_7] : memref<32x1xf32, #tpu.memory_space<vmem>>, vector<32x1xf32>
    %9 = vector.broadcast %8 : vector<32x1xf32> to vector<32x256xf32>
    %10 = arith.addf %7, %9 : vector<32x256xf32>
    %cst_8 = arith.constant 3.000000e+00 : f32
    %11 = vector.broadcast %cst_8 : f32 to vector<32x256xf32>
    %12 = arith.addf %10, %11 : vector<32x256xf32>
    %cst_9 = arith.constant 0.000000e+00 : f32
    %cst_10 = arith.constant 6.000000e+00 : f32
    %13 = vector.broadcast %cst_9 : f32 to vector<32x256xf32>
    %14 = arith.maximumf %13, %12 : vector<32x256xf32>
    %15 = vector.broadcast %cst_10 : f32 to vector<32x256xf32>
    %16 = arith.minimumf %15, %14 : vector<32x256xf32>
    %17 = arith.mulf %10, %16 : vector<32x256xf32>
    %cst_11 = arith.constant 0.166666672 : f32
    %18 = vector.broadcast %cst_11 : f32 to vector<32x256xf32>
    %19 = arith.mulf %17, %18 : vector<32x256xf32>
    %20 = arith.truncf %19 : vector<32x256xf32> to vector<32x256xbf16>
    %c0_12 = arith.constant 0 : index
    %c0_13 = arith.constant 0 : index
    %c0_14 = arith.constant 0 : index
    %21 = vector.load %arg6[%c0_12, %c0_13, %c0_14] : memref<1x32x256xbf16, #tpu.memory_space<vmem>>, vector<1x32x256xbf16>
    %22 = vector.shape_cast %21 : vector<1x32x256xbf16> to vector<32x256xbf16>
    %23 = vector.shape_cast %20 : vector<32x256xbf16> to vector<1x32x256xbf16>
    tpu.vector_store %arg6[%c0_12, %c0_13, %c0_14], %23 {strides = array<i32>} : memref<1x32x256xbf16, #tpu.memory_space<vmem>>, vector<1x32x256xbf16>,
    return
  }
  func.func @transform_0(%arg0: i32, %arg1: i32) -> (i32, i32, i32) {
    %c0_i32 = arith.constant 0 : i32
    %c0_i32_0 = arith.constant 0 : i32
    return %arg0, %c0_i32, %arg1 : i32, i32, i32
  }
  func.func @transform_1(%arg0: i32, %arg1: i32) -> (i32, i32) {
    %c0_i32 = arith.constant 0 : i32
    %c0_i32_0 = arith.constant 0 : i32
    %c0_i32_1 = arith.constant 0 : i32
    return %c0_i32, %c0_i32_0 : i32, i32
  }
  func.func @transform_2(%arg0: i32, %arg1: i32) -> (i32, i32) {
    %c0_i32 = arith.constant 0 : i32
    %c0_i32_0 = arith.constant 0 : i32
    %c0_i32_1 = arith.constant 0 : i32
    return %c0_i32, %c0_i32_0 : i32, i32
  }
  func.func @transform_3(%arg0: i32, %arg1: i32) -> (i32, i32) {
    %c0_i32 = arith.constant 0 : i32
    %c0_i32_0 = arith.constant 0 : i32
    %c0_i32_1 = arith.constant 0 : i32
    return %c0_i32, %c0_i32_0 : i32, i32
  }
  func.func @transform_4(%arg0: i32, %arg1: i32) -> (i32, i32, i32) {
    %c0_i32 = arith.constant 0 : i32
    %c0_i32_0 = arith.constant 0 : i32
    return %arg0, %c0_i32, %arg1 : i32, i32, i32
  }
}

</mosaic_0001>

<llo_original>
// kernel: pixel_shuffle_block.2
$region0: #{pixel_shuffle_block.2}
  #allocation0 [shape = 'u32[]', space=smem, size = 0x4, offset = 0x4, fixed_abs, tag = 'smem constant byte address 0x4 - core index']
  #allocation1 [shape = 'u32[72,128]{1,0:T(1,128)}', space=vmem, size = 0x9000, scoped, tag = 'internal scratch']
  %s0 = inlined_call_operand.vmem [shape: f32[2,16,256], index: 0, kind: input, shape index: {}]
  %s1 = inlined_call_operand.vmem [shape: bf16[32,16], index: 1, kind: input, shape index: {}]
  %s2 = inlined_call_operand.vmem [shape: f32[2,32,8], index: 2, kind: output, shape index: {0}]
  %s3 = inlined_call_operand.vmem [shape: f32[2,32,8], index: 3, kind: output, shape index: {1}]
  %4 = xla_tuple %s2, %s3
  %s5 = sld [smem:[#allocation0]]
  $region49: #{pixel_shuffle_block.2} parent=0
    _
  %s7 = ssub.s32 1, %s5
  %s8 = scalar_select 0, %s7, %s5
  loop: start=0, step=1, limit=4
  $region2: #{pixel_shuffle_block.2} parent=0 // loop_pre_header
    _
  $region3: #{pixel_shuffle_block.2} parent=0 // loop_header
    %s10 = sphi 0, %s14
    %p11 = scmp.ge.s32.totalorder %s10, 4
    %s17 = sphi 0, %s29
    %s18 = sphi 0, %s25
    %s19 = sphi 0, %s17
    %s20 = sphi 0, %s18
    %s21 = sphi 0, %s19
    %s22 = sphi 0, %s20
    %s34 = sphi 0, %s36
    %s37 = sphi 0, %s34
    %s38 = sphi 0, %s37
    %s54 = sphi 0, %s38
    %s58 = sphi 0, %s58
    %s60 = sphi 0, %s58
    %s61 = sphi 0, %s60
    %s75 = sphi 0, %s61
    %s83 = sphi 0, %s85
    %s86 = sphi 0, %s83
    %s87 = sphi 0, %s86
    %s103 = sphi 0, %s87
    %s111 = sphi 0, %s113
    %s114 = sphi 0, %s111
    %s115 = sphi 0, %s114
    %s131 = sphi 0, %s115
  $region4: #{pixel_shuffle_block.2} parent=0 // loop_header_branch
    %13 = sbr.rel (%p11) target = $region8
  $region5: #{pixel_shuffle_block.2} parent=0 // loop_body
    %s15 = ssub.s32 %s10, 1
    %s16 = ssub.s32 %s10, 2
    %s23 = sadd.s32 1, %s18
    %p24 = scmp.ge.s32.totalorder %s23, 1
    %s25 = scalar_select %p24, 0, %s23
    %s26 = sadd.s32 1, %s17
    %s27 = scalar_select %p24, %s26, %s17
    %p28 = scmp.ge.s32.totalorder %s27, 2
    %s29 = scalar_select %p28, 0, %s27
    %s30 = ssub.s32 %s17, %s29
    %s31 = ssub.s32 %s18, %s25
    %s32 = sor.u32 %s30, %s31
    %p33 = scmp.eq.s32.totalorder %s32, 0
    %s35 = sadd.s32 %s34, 1
    %s36 = scalar_select %p33, %s34, %s35
    %p39 = pneg %p33
    %p40 = scmp.eq.s32.totalorder %s10, 1
    %p41 = por %p39, %p40
    %p42 = scmp.ne.s32.totalorder %s34, %s37
    %p43 = scmp.eq.s32.totalorder %s10, 0
    %p44 = por %p42, %p43
    %p45 = scmp.ne.s32.totalorder %s34, %s37
    %p46 = scmp.eq.s32.totalorder %s15, 1
    %p47 = por %p45, %p46
    %p48 = scmp.ne.s32.totalorder %s37, %s38
    %p49 = scmp.eq.s32.totalorder %s15, 0
    %p50 = por %p48, %p49
    %p51 = scmp.ne.s32.totalorder %s37, %s38
    %p52 = scmp.eq.s32.totalorder %s16, 1
    %p53 = por %p51, %p52
    %p55 = scmp.ne.s32.totalorder %s38, %s54
    %p56 = scmp.eq.s32.totalorder %s16, 0
    %p57 = por %p55, %p56
    %s59 = sadd.s32 %s58, 1
    %p62 = scmp.eq.s32.totalorder %s10, 1
    %p63 = scmp.ne.s32.totalorder %s58, %s60
    %p64 = scmp.eq.s32.totalorder %s10, 0
    %p65 = por %p63, %p64
    %p66 = scmp.ne.s32.totalorder %s58, %s60
    %p67 = scmp.eq.s32.totalorder %s15, 1
    %p68 = por %p66, %p67
    %p69 = scmp.ne.s32.totalorder %s60, %s61
    %p70 = scmp.eq.s32.totalorder %s15, 0
    %p71 = por %p69, %p70
    %p72 = scmp.ne.s32.totalorder %s60, %s61
    %p73 = scmp.eq.s32.totalorder %s16, 1
    %p74 = por %p72, %p73
    %p76 = scmp.ne.s32.totalorder %s61, %s75
    %p77 = scmp.eq.s32.totalorder %s16, 0
    %p78 = por %p76, %p77
    %s79 = sadd.s32 %s17, %s18
    %s80 = sadd.s32 %s29, %s25
    %s81 = ssub.s32 %s79, %s80
    %p82 = scmp.eq.s32.totalorder %s81, 0
    %s84 = sadd.s32 %s83, 1
    %s85 = scalar_select %p82, %s83, %s84
    %p88 = pneg %p82
    %p89 = scmp.eq.s32.totalorder %s10, 1
    %p90 = por %p88, %p89
    %p91 = scmp.ne.s32.totalorder %s83, %s86
    %p92 = scmp.eq.s32.totalorder %s10, 0
    %p93 = por %p91, %p92
    %p94 = scmp.ne.s32.totalorder %s83, %s86
    %p95 = scmp.eq.s32.totalorder %s15, 1
    %p96 = por %p94, %p95
    %p97 = scmp.ne.s32.totalorder %s86, %s87
    %p98 = scmp.eq.s32.totalorder %s15, 0
    %p99 = por %p97, %p98
    %p100 = scmp.ne.s32.totalorder %s86, %s87
    %p101 = scmp.eq.s32.totalorder %s16, 1
    %p102 = por %p100, %p101
    %p104 = scmp.ne.s32.totalorder %s87, %s103
    %p105 = scmp.eq.s32.totalorder %s16, 0
    %p106 = por %p104, %p105
    %s107 = sadd.s32 %s17, %s18
    %s108 = sadd.s32 %s29, %s25
    %s109 = ssub.s32 %s107, %s108
    %p110 = scmp.eq.s32.totalorder %s109, 0
    %s112 = sadd.s32 %s111, 1
    %s113 = scalar_select %p110, %s111, %s112
    %p116 = pneg %p110
    %p117 = scmp.eq.s32.totalorder %s10, 1
    %p118 = por %p116, %p117
    %p119 = scmp.ne.s32.totalorder %s111, %s114
    %p120 = scmp.eq.s32.totalorder %s10, 0
    %p121 = por %p119, %p120
    %p122 = scmp.ne.s32.totalorder %s111, %s114
    %p123 = scmp.eq.s32.totalorder %s15, 1
    %p124 = por %p122, %p123
    %p125 = scmp.ne.s32.totalorder %s114, %s115
    %p126 = scmp.eq.s32.totalorder %s15, 0
    %p127 = por %p125, %p126
    %p128 = scmp.ne.s32.totalorder %s114, %s115
    %p129 = scmp.eq.s32.totalorder %s16, 1
    %p130 = por %p128, %p129
    %p132 = scmp.ne.s32.totalorder %s115, %s131
    %p133 = scmp.eq.s32.totalorder %s16, 0
    %p134 = por %p132, %p133
    %p135 = scmp.le.s32.totalorder 1, %s10
    %p136 = scmp.lt.s32.totalorder %s10, 3
    %p137 = pnand %p135, %p136
    %p138 = pneg %p137
    // Predicated region
    $region9: #{pixel_shuffle_block.2} parent=5 // pred_check
      _
    $region10: #{pixel_shuffle_block.2} parent=5 // pred_check_branch
      %140 = sbr.rel (%p137) target = $region12
    $region11: #{pixel_shuffle_block.2} parent=5 // pred_region
      %s141 = ssub.s32 %s10, 1
      // Predicated region
      $region13: #{pixel_shuffle_block.2} parent=11 // pred_check
        %p142 = pneg %p71
      $region14: #{pixel_shuffle_block.2} parent=11 // pred_check_branch
        %144 = sbr.rel (%p142) target = $region16
      $region15: #{pixel_shuffle_block.2} parent=11 // pred_region
        _
      $region16: #{pixel_shuffle_block.2} parent=11 // pred_fallthru
        _
    $region12: #{pixel_shuffle_block.2} parent=5 // pred_fallthru
      _
    %p145 = scmp.lt.s32.totalorder %s10, 2
    // Predicated region
    $region17: #{pixel_shuffle_block.2} parent=5 // pred_check
      %p146 = pneg %p145
    $region18: #{pixel_shuffle_block.2} parent=5 // pred_check_branch
      %148 = sbr.rel (%p146) target = $region20
    $region19: #{pixel_shuffle_block.2} parent=5 // pred_region
      // Predicated region
      $region21: #{pixel_shuffle_block.2} parent=19 // pred_check
        %p149 = pneg %p44
      $region22: #{pixel_shuffle_block.2} parent=19 // pred_check_branch
        %151 = sbr.rel (%p149) target = $region24
      $region23: #{pixel_shuffle_block.2} parent=19 // pred_region
        %s152 = smul.u32 2, %s18
        %p153 = scmp.lt.s32.totalorder %s17, 1
        %s154 = scalar_select %p153, %s17, 1
        %p155 = scmp.lt.s32.totalorder %s152, 1
        %s156 = scalar_select %p155, %s152, 1
        %s157 = smul.addr %s154, 4
        %s158 = sadd.s32 %s156, %s157
        %s159 = smul.addr %s158, 8
        %s160 = scalar_lea.vmem %s0, %s159
        %s161 = smul.u32 2, %s18
      $region24: #{pixel_shuffle_block.2} parent=19 // pred_fallthru
        _
    $region20: #{pixel_shuffle_block.2} parent=5 // pred_fallthru
      _
    %p162 = scmp.le.s32.totalorder 1, %s10
    %p163 = scmp.lt.s32.totalorder %s10, 3
    %p164 = pnand %p162, %p163
    %p165 = pneg %p164
    // Predicated region
    $region25: #{pixel_shuffle_block.2} parent=5 // pred_check
      _
    $region26: #{pixel_shuffle_block.2} parent=5 // pred_check_branch
      %167 = sbr.rel (%p164) target = $region28
    $region27: #{pixel_shuffle_block.2} parent=5 // pred_region
      %s168 = ssub.s32 %s10, 1
      %s169 = smul.u32 2, %s20
      %p170 = scmp.lt.s32.totalorder %s19, 1
      %s171 = scalar_select %p170, %s19, 1
      %p172 = scmp.lt.s32.totalorder %s169, 1
      %s173 = scalar_select %p172, %s169, 1
      %s174 = smul.addr %s171, 4
      %s175 = sadd.s32 %s173, %s174
      %s176 = smul.addr %s175, 8
      %s177 = scalar_lea.vmem %s0, %s176
      %p178 = pneg %p50
      %p179 = pneg %p47
      %p180 = pneg %p71
      %p181 = pneg %p68
      %p182 = pneg %p99
      %p183 = pneg %p96
      %s184 = sadd.s32 %s19, %s20
      %p185 = scmp.lt.s32.totalorder %s184, 1
      %s186 = scalar_select %p185, %s184, 1
      %s187 = smul.addr %s186, 4
      %s188 = smul.addr %s187, 8
      %s189 = scalar_lea.vmem %s2, %s188
      %p190 = pneg %p127
      %p191 = pneg %p124
      %s192 = sadd.s32 %s19, %s20
      %p193 = scmp.lt.s32.totalorder %s192, 1
      %s194 = scalar_select %p193, %s192, 1
      %s195 = smul.addr %s194, 4
      %s196 = smul.addr %s195, 8
      %s197 = scalar_lea.vmem %s3, %s196
      %s198 = smul.u32 2, %s20
      %p199 = scmp.lt.s32.totalorder %s19, 1
      %s200 = scalar_select %p199, %s19, 1
      %p201 = scmp.lt.s32.totalorder %s198, 1
      %s202 = scalar_select %p201, %s198, 1
      %s203 = smul.addr %s200, 4
      %s204 = sadd.s32 %s202, %s203
      %s205 = smul.addr %s204, 8
      %s206 = scalar_lea.vmem %s0, %s205
      %s207 = smul.u32 2, %s20
      %s208 = sadd.s32 %s19, %s20
      %p209 = scmp.lt.s32.totalorder %s208, 1
      %s210 = scalar_select %p209, %s208, 1
      %s211 = smul.addr %s210, 4
      %s212 = smul.addr %s211, 8
      %s213 = scalar_lea.vmem %s2, %s212
      %s214 = sadd.s32 %s19, %s20
      %s215 = sadd.s32 %s19, %s20
      %p216 = scmp.lt.s32.totalorder %s215, 1
      %s217 = scalar_select %p216, %s215, 1
      %s218 = smul.addr %s217, 4
      %s219 = smul.addr %s218, 8
      %s220 = scalar_lea.vmem %s3, %s219
      %s221 = sadd.s32 %s19, %s20
      %v223 = vld [vmem:[%s206] sm:$0xff]
      %v224 = vld [vmem:[%s206 + $0x8] sm:$0xff]
      %v225 = vld [vmem:[%s206 + $0x10] sm:$0xff]
      %v226 = vld [vmem:[%s206 + $0x18] sm:$0xff]
      %v227 = vpack.c.bf16 %v225, %v223
      %v228 = vpack.c.bf16 %v226, %v224
      %v229 = vld [vmem:[%s1] sm:$0xf]
      %v230 = vld [vmem:[%s1 + $0x4] sm:$0xf]
      %v231 = vld [vmem:[%s1 + $0x8] sm:$0xf]
      %v232 = vld [vmem:[%s1 + $0xc] sm:$0xf]
      %v237 = vunpack.c.l.b16 %v229
      %v238 = vunpack.c.l.b16 %v230
      %v239 = vunpack.c.l.b16 %v231
      %v240 = vunpack.c.l.b16 %v232
      %v241 = vpack.c.b16 %v238, %v237
      %v242 = vpack.c.b16 %v240, %v239
      %vm243 = vcmask 130048
      %v245 = vsel %vm243, %v241, 0
      %v248 = vsel %vm243, %v242, 0
      %250 = vmatpush.bf16.msra.mxu0 0
      %251 = vmatpush.bf16.msra.mxu0 0
      %252 = vmatpush.bf16.msra.mxu0 0
      %253 = vmatpush.bf16.msra.mxu0 0
      %254 = vmatpush.bf16.msra.mxu0 0
      %255 = vmatpush.bf16.msra.mxu0 0
      %256 = vmatpush.bf16.msra.mxu0 0
      %257 = vmatpush.bf16.msra.mxu0 %v227
      %258 = vmatmul.bf16.gmra.mxu0 %v245
      %v259 = vpop.f32.mrf.mxu0
      %v260 = vadd.f32 0.0, %v259
      %v261 = vpop.f32.mrf.mxu0
      %v262 = vadd.f32 0.0, %v261
      %263 = vmatmul.bf16.gmra.mxu0 %v248
      %v264 = vpop.f32.mrf.mxu0
      %v265 = vadd.f32 0.0, %v264
      %v266 = vpop.f32.mrf.mxu0
      %v267 = vadd.f32 0.0, %v266
      %268 = vdwg.mxu0
      %269 = vmatpush.bf16.msra.mxu0 0
      %270 = vmatpush.bf16.msra.mxu0 0
      %271 = vmatpush.bf16.msra.mxu0 0
      %272 = vmatpush.bf16.msra.mxu0 0
      %273 = vmatpush.bf16.msra.mxu0 0
      %274 = vmatpush.bf16.msra.mxu0 0
      %275 = vmatpush.bf16.msra.mxu0 0
      %276 = vmatpush.bf16.msra.mxu0 %v228
      %277 = vmatmul.bf16.gmra.mxu0 %v245
      %v278 = vpop.f32.mrf.mxu0
      %v279 = vadd.f32 0.0, %v278
      %v280 = vpop.f32.mrf.mxu0
      %v281 = vadd.f32 0.0, %v280
      %282 = vmatmul.bf16.gmra.mxu0 %v248
      %v283 = vpop.f32.mrf.mxu0
      %v284 = vadd.f32 0.0, %v283
      %v285 = vpop.f32.mrf.mxu0
      %v286 = vadd.f32 0.0, %v285
      %287 = vdwg.mxu0
      %v288 = vadd.f32 %v260, %v279
      %289 = vadd.xlane.f32.xlu0 %v288
      %v290 = vpop.xlane.xlu0 %289
      %v291 = vadd.f32 %v262, %v281
      %292 = vadd.xlane.f32.xlu0 %v291
      %v293 = vpop.xlane.xlu0 %292
      %v294 = vadd.f32 %v265, %v284
      %295 = vadd.xlane.f32.xlu0 %v294
      %v296 = vpop.xlane.xlu0 %295
      %v297 = vadd.f32 %v267, %v286
      %298 = vadd.xlane.f32.xlu0 %v297
      %v299 = vpop.xlane.xlu0 %298
      %v300 = vmul.f32 %v260, %v260
      %v301 = vmul.f32 %v279, %v279
      %v302 = vmul.f32 %v262, %v262
      %v303 = vmul.f32 %v281, %v281
      %v304 = vmul.f32 %v265, %v265
      %v305 = vmul.f32 %v284, %v284
      %v306 = vmul.f32 %v267, %v267
      %v307 = vmul.f32 %v286, %v286
      %v308 = vadd.f32 %v300, %v301
      %309 = vadd.xlane.f32.xlu0 %v308
      %v310 = vpop.xlane.xlu0 %309
      %v311 = vadd.f32 %v302, %v303
      %312 = vadd.xlane.f32.xlu0 %v311
      %v313 = vpop.xlane.xlu0 %312
      %v314 = vadd.f32 %v304, %v305
      %315 = vadd.xlane.f32.xlu0 %v314
      %v316 = vpop.xlane.xlu0 %315
      %v317 = vadd.f32 %v306, %v307
      %318 = vadd.xlane.f32.xlu0 %v317
      %v319 = vpop.xlane.xlu0 %318
      %vm320 = vcmask 64512
      %321 = vst.msk [vmem:[%s213] sm:$0xff] %vm320, %v290
      %322 = vst.msk [vmem:[%s213 + $0x8] sm:$0xff] %vm320, %v293
      %323 = vst.msk [vmem:[%s213 + $0x10] sm:$0xff] %vm320, %v296
      %324 = vst.msk [vmem:[%s213 + $0x18] sm:$0xff] %vm320, %v299
      %325 = vst.msk [vmem:[%s220] sm:$0xff] %vm320, %v310
      %326 = vst.msk [vmem:[%s220 + $0x8] sm:$0xff] %vm320, %v313
      %327 = vst.msk [vmem:[%s220 + $0x10] sm:$0xff] %vm320, %v316
      %328 = vst.msk [vmem:[%s220 + $0x18] sm:$0xff] %vm320, %v319
      %s329 = sadd.s32 %s19, %s20
      %p330 = scmp.lt.s32.totalorder %s329, 1
      %s331 = scalar_select %p330, %s329, 1
      %s332 = smul.addr %s331, 4
      %s333 = smul.addr %s332, 8
      %s334 = scalar_lea.vmem %s2, %s333
      %s335 = sadd.s32 %s19, %s20
      %p336 = scmp.lt.s32.totalorder %s335, 1
      %s337 = scalar_select %p336, %s335, 1
      %s338 = smul.addr %s337, 4
      %s339 = smul.addr %s338, 8
      %s340 = scalar_lea.vmem %s3, %s339
      // Predicated region
      $region29: #{pixel_shuffle_block.2} parent=27 // pred_check
        %p341 = pneg %p96
      $region30: #{pixel_shuffle_block.2} parent=27 // pred_check_branch
        %343 = sbr.rel (%p341) target = $region32
      $region31: #{pixel_shuffle_block.2} parent=27 // pred_region
        %s344 = sadd.s32 %s19, %s20
      $region32: #{pixel_shuffle_block.2} parent=27 // pred_fallthru
        _
      // Predicated region
      $region33: #{pixel_shuffle_block.2} parent=27 // pred_check
        %p345 = pneg %p124
      $region34: #{pixel_shuffle_block.2} parent=27 // pred_check_branch
        %347 = sbr.rel (%p345) target = $region36
      $region35: #{pixel_shuffle_block.2} parent=27 // pred_region
        %s348 = sadd.s32 %s19, %s20
      $region36: #{pixel_shuffle_block.2} parent=27 // pred_fallthru
        _
    $region28: #{pixel_shuffle_block.2} parent=5 // pred_fallthru
      _
    %p349 = scmp.le.s32.totalorder 2, %s10
    // Predicated region
    $region37: #{pixel_shuffle_block.2} parent=5 // pred_check
      %p350 = pneg %p349
    $region38: #{pixel_shuffle_block.2} parent=5 // pred_check_branch
      %352 = sbr.rel (%p350) target = $region40
    $region39: #{pixel_shuffle_block.2} parent=5 // pred_region
      %s353 = ssub.s32 %s10, 2
      // Predicated region
      $region41: #{pixel_shuffle_block.2} parent=39 // pred_check
        %p354 = pneg %p102
      $region42: #{pixel_shuffle_block.2} parent=39 // pred_check_branch
        %356 = sbr.rel (%p354) target = $region44
      $region43: #{pixel_shuffle_block.2} parent=39 // pred_region
        %s357 = sadd.s32 %s21, %s22
        %p358 = scmp.lt.s32.totalorder %s357, 1
        %s359 = scalar_select %p358, %s357, 1
        %s360 = smul.addr %s359, 4
        %s361 = smul.addr %s360, 8
        %s362 = scalar_lea.vmem %s2, %s361
      $region44: #{pixel_shuffle_block.2} parent=39 // pred_fallthru
        _
      // Predicated region
      $region45: #{pixel_shuffle_block.2} parent=39 // pred_check
        %p363 = pneg %p130
      $region46: #{pixel_shuffle_block.2} parent=39 // pred_check_branch
        %365 = sbr.rel (%p363) target = $region48
      $region47: #{pixel_shuffle_block.2} parent=39 // pred_region
        %s366 = sadd.s32 %s21, %s22
        %p367 = scmp.lt.s32.totalorder %s366, 1
        %s368 = scalar_select %p367, %s366, 1
        %s369 = smul.addr %s368, 4
        %s370 = smul.addr %s369, 8
        %s371 = scalar_lea.vmem %s3, %s370
      $region48: #{pixel_shuffle_block.2} parent=39 // pred_fallthru
        _
    $region40: #{pixel_shuffle_block.2} parent=5 // pred_fallthru
      _
  $region6: #{pixel_shuffle_block.2} parent=0 // loop_footer
    %s14 = sadd.s32 1, %s10
  $region7: #{pixel_shuffle_block.2} parent=0 // loop_footer_branch
    %9 = sbr.rel target = $region3
  $region8: #{pixel_shuffle_block.2} parent=0 // loop_exit
    _

// kernel: pixel_shuffle_block.3
$region0: #{pixel_shuffle_block.3}
  #allocation0 [shape = 'u32[]', space=smem, size = 0x4, offset = 0x4, fixed_abs, tag = 'smem constant byte address 0x4 - core index']
  #allocation1 [shape = 'u32[72,128]{1,0:T(1,128)}', space=vmem, size = 0x9000, scoped, tag = 'internal scratch']
  %s0 = inlined_call_operand.vmem [shape: f32[2,16,256], index: 0, kind: input, shape index: {}]
  %s1 = inlined_call_operand.vmem [shape: bf16[32,16], index: 1, kind: input, shape index: {}]
  %s2 = inlined_call_operand.vmem [shape: f32[32,1], index: 2, kind: input, shape index: {}]
  %s3 = inlined_call_operand.vmem [shape: f32[32,1], index: 3, kind: input, shape index: {}]
  %s4 = inlined_call_operand.vmem [shape: bf16[2,32,256], index: 4, kind: output, shape index: {}]
  %s5 = sld [smem:[#allocation0]]
  $region49: #{pixel_shuffle_block.3} parent=0
    _
  %s7 = ssub.s32 1, %s5
  %s8 = scalar_select 0, %s7, %s5
  loop: start=0, step=1, limit=4
  $region2: #{pixel_shuffle_block.3} parent=0 // loop_pre_header
    _
  $region3: #{pixel_shuffle_block.3} parent=0 // loop_header
    %s10 = sphi 0, %s14
    %p11 = scmp.ge.s32.totalorder %s10, 4
    %s17 = sphi 0, %s29
    %s18 = sphi 0, %s25
    %s19 = sphi 0, %s17
    %s20 = sphi 0, %s18
    %s21 = sphi 0, %s19
    %s22 = sphi 0, %s20
    %s34 = sphi 0, %s36
    %s37 = sphi 0, %s34
    %s38 = sphi 0, %s37
    %s54 = sphi 0, %s38
    %s58 = sphi 0, %s58
    %s60 = sphi 0, %s58
    %s61 = sphi 0, %s60
    %s75 = sphi 0, %s61
    %s79 = sphi 0, %s79
    %s81 = sphi 0, %s79
    %s82 = sphi 0, %s81
    %s96 = sphi 0, %s82
    %s100 = sphi 0, %s100
    %s102 = sphi 0, %s100
    %s103 = sphi 0, %s102
    %s117 = sphi 0, %s103
    %s125 = sphi 0, %s127
    %s128 = sphi 0, %s125
    %s129 = sphi 0, %s128
    %s145 = sphi 0, %s129
  $region4: #{pixel_shuffle_block.3} parent=0 // loop_header_branch
    %13 = sbr.rel (%p11) target = $region8
  $region5: #{pixel_shuffle_block.3} parent=0 // loop_body
    %s15 = ssub.s32 %s10, 1
    %s16 = ssub.s32 %s10, 2
    %s23 = sadd.s32 1, %s18
    %p24 = scmp.ge.s32.totalorder %s23, 1
    %s25 = scalar_select %p24, 0, %s23
    %s26 = sadd.s32 1, %s17
    %s27 = scalar_select %p24, %s26, %s17
    %p28 = scmp.ge.s32.totalorder %s27, 2
    %s29 = scalar_select %p28, 0, %s27
    %s30 = ssub.s32 %s17, %s29
    %s31 = ssub.s32 %s18, %s25
    %s32 = sor.u32 %s30, %s31
    %p33 = scmp.eq.s32.totalorder %s32, 0
    %s35 = sadd.s32 %s34, 1
    %s36 = scalar_select %p33, %s34, %s35
    %p39 = pneg %p33
    %p40 = scmp.eq.s32.totalorder %s10, 1
    %p41 = por %p39, %p40
    %p42 = scmp.ne.s32.totalorder %s34, %s37
    %p43 = scmp.eq.s32.totalorder %s10, 0
    %p44 = por %p42, %p43
    %p45 = scmp.ne.s32.totalorder %s34, %s37
    %p46 = scmp.eq.s32.totalorder %s15, 1
    %p47 = por %p45, %p46
    %p48 = scmp.ne.s32.totalorder %s37, %s38
    %p49 = scmp.eq.s32.totalorder %s15, 0
    %p50 = por %p48, %p49
    %p51 = scmp.ne.s32.totalorder %s37, %s38
    %p52 = scmp.eq.s32.totalorder %s16, 1
    %p53 = por %p51, %p52
    %p55 = scmp.ne.s32.totalorder %s38, %s54
    %p56 = scmp.eq.s32.totalorder %s16, 0
    %p57 = por %p55, %p56
    %s59 = sadd.s32 %s58, 1
    %p62 = scmp.eq.s32.totalorder %s10, 1
    %p63 = scmp.ne.s32.totalorder %s58, %s60
    %p64 = scmp.eq.s32.totalorder %s10, 0
    %p65 = por %p63, %p64
    %p66 = scmp.ne.s32.totalorder %s58, %s60
    %p67 = scmp.eq.s32.totalorder %s15, 1
    %p68 = por %p66, %p67
    %p69 = scmp.ne.s32.totalorder %s60, %s61
    %p70 = scmp.eq.s32.totalorder %s15, 0
    %p71 = por %p69, %p70
    %p72 = scmp.ne.s32.totalorder %s60, %s61
    %p73 = scmp.eq.s32.totalorder %s16, 1
    %p74 = por %p72, %p73
    %p76 = scmp.ne.s32.totalorder %s61, %s75
    %p77 = scmp.eq.s32.totalorder %s16, 0
    %p78 = por %p76, %p77
    %s80 = sadd.s32 %s79, 1
    %p83 = scmp.eq.s32.totalorder %s10, 1
    %p84 = scmp.ne.s32.totalorder %s79, %s81
    %p85 = scmp.eq.s32.totalorder %s10, 0
    %p86 = por %p84, %p85
    %p87 = scmp.ne.s32.totalorder %s79, %s81
    %p88 = scmp.eq.s32.totalorder %s15, 1
    %p89 = por %p87, %p88
    %p90 = scmp.ne.s32.totalorder %s81, %s82
    %p91 = scmp.eq.s32.totalorder %s15, 0
    %p92 = por %p90, %p91
    %p93 = scmp.ne.s32.totalorder %s81, %s82
    %p94 = scmp.eq.s32.totalorder %s16, 1
    %p95 = por %p93, %p94
    %p97 = scmp.ne.s32.totalorder %s82, %s96
    %p98 = scmp.eq.s32.totalorder %s16, 0
    %p99 = por %p97, %p98
    %s101 = sadd.s32 %s100, 1
    %p104 = scmp.eq.s32.totalorder %s10, 1
    %p105 = scmp.ne.s32.totalorder %s100, %s102
    %p106 = scmp.eq.s32.totalorder %s10, 0
    %p107 = por %p105, %p106
    %p108 = scmp.ne.s32.totalorder %s100, %s102
    %p109 = scmp.eq.s32.totalorder %s15, 1
    %p110 = por %p108, %p109
    %p111 = scmp.ne.s32.totalorder %s102, %s103
    %p112 = scmp.eq.s32.totalorder %s15, 0
    %p113 = por %p111, %p112
    %p114 = scmp.ne.s32.totalorder %s102, %s103
    %p115 = scmp.eq.s32.totalorder %s16, 1
    %p116 = por %p114, %p115
    %p118 = scmp.ne.s32.totalorder %s103, %s117
    %p119 = scmp.eq.s32.totalorder %s16, 0
    %p120 = por %p118, %p119
    %s121 = ssub.s32 %s17, %s29
    %s122 = ssub.s32 %s18, %s25
    %s123 = sor.u32 %s121, %s122
    %p124 = scmp.eq.s32.totalorder %s123, 0
    %s126 = sadd.s32 %s125, 1
    %s127 = scalar_select %p124, %s125, %s126
    %p130 = pneg %p124
    %p131 = scmp.eq.s32.totalorder %s10, 1
    %p132 = por %p130, %p131
    %p133 = scmp.ne.s32.totalorder %s125, %s128
    %p134 = scmp.eq.s32.totalorder %s10, 0
    %p135 = por %p133, %p134
    %p136 = scmp.ne.s32.totalorder %s125, %s128
    %p137 = scmp.eq.s32.totalorder %s15, 1
    %p138 = por %p136, %p137
    %p139 = scmp.ne.s32.totalorder %s128, %s129
    %p140 = scmp.eq.s32.totalorder %s15, 0
    %p141 = por %p139, %p140
    %p142 = scmp.ne.s32.totalorder %s128, %s129
    %p143 = scmp.eq.s32.totalorder %s16, 1
    %p144 = por %p142, %p143
    %p146 = scmp.ne.s32.totalorder %s129, %s145
    %p147 = scmp.eq.s32.totalorder %s16, 0
    %p148 = por %p146, %p147
    %p149 = scmp.le.s32.totalorder 1, %s10
    %p150 = scmp.lt.s32.totalorder %s10, 3
    %p151 = pnand %p149, %p150
    %p152 = pneg %p151
    // Predicated region
    $region9: #{pixel_shuffle_block.3} parent=5 // pred_check
      _
    $region10: #{pixel_shuffle_block.3} parent=5 // pred_check_branch
      %154 = sbr.rel (%p151) target = $region12
    $region11: #{pixel_shuffle_block.3} parent=5 // pred_region
      %s155 = ssub.s32 %s10, 1
      // Predicated region
      $region13: #{pixel_shuffle_block.3} parent=11 // pred_check
        %p156 = pneg %p71
      $region14: #{pixel_shuffle_block.3} parent=11 // pred_check_branch
        %158 = sbr.rel (%p156) target = $region16
      $region15: #{pixel_shuffle_block.3} parent=11 // pred_region
        _
      $region16: #{pixel_shuffle_block.3} parent=11 // pred_fallthru
        _
      // Predicated region
      $region17: #{pixel_shuffle_block.3} parent=11 // pred_check
        %p159 = pneg %p92
      $region18: #{pixel_shuffle_block.3} parent=11 // pred_check_branch
        %161 = sbr.rel (%p159) target = $region20
      $region19: #{pixel_shuffle_block.3} parent=11 // pred_region
        _
      $region20: #{pixel_shuffle_block.3} parent=11 // pred_fallthru
        _
      // Predicated region
      $region21: #{pixel_shuffle_block.3} parent=11 // pred_check
        %p162 = pneg %p113
      $region22: #{pixel_shuffle_block.3} parent=11 // pred_check_branch
        %164 = sbr.rel (%p162) target = $region24
      $region23: #{pixel_shuffle_block.3} parent=11 // pred_region
        _
      $region24: #{pixel_shuffle_block.3} parent=11 // pred_fallthru
        _
    $region12: #{pixel_shuffle_block.3} parent=5 // pred_fallthru
      _
    %p165 = scmp.lt.s32.totalorder %s10, 2
    // Predicated region
    $region25: #{pixel_shuffle_block.3} parent=5 // pred_check
      %p166 = pneg %p165
    $region26: #{pixel_shuffle_block.3} parent=5 // pred_check_branch
      %168 = sbr.rel (%p166) target = $region28
    $region27: #{pixel_shuffle_block.3} parent=5 // pred_region
      // Predicated region
      $region29: #{pixel_shuffle_block.3} parent=27 // pred_check
        %p169 = pneg %p44
      $region30: #{pixel_shuffle_block.3} parent=27 // pred_check_branch
        %171 = sbr.rel (%p169) target = $region32
      $region31: #{pixel_shuffle_block.3} parent=27 // pred_region
        %s172 = smul.u32 2, %s18
        %p173 = scmp.lt.s32.totalorder %s17, 1
        %s174 = scalar_select %p173, %s17, 1
        %p175 = scmp.lt.s32.totalorder %s172, 1
        %s176 = scalar_select %p175, %s172, 1
        %s177 = smul.addr %s174, 4
        %s178 = sadd.s32 %s176, %s177
        %s179 = smul.addr %s178, 8
        %s180 = scalar_lea.vmem %s0, %s179
        %s181 = smul.u32 2, %s18
      $region32: #{pixel_shuffle_block.3} parent=27 // pred_fallthru
        _
    $region28: #{pixel_shuffle_block.3} parent=5 // pred_fallthru
      _
    %p182 = scmp.le.s32.totalorder 1, %s10
    %p183 = scmp.lt.s32.totalorder %s10, 3
    %p184 = pnand %p182, %p183
    %p185 = pneg %p184
    // Predicated region
    $region33: #{pixel_shuffle_block.3} parent=5 // pred_check
      _
    $region34: #{pixel_shuffle_block.3} parent=5 // pred_check_branch
      %187 = sbr.rel (%p184) target = $region36
    $region35: #{pixel_shuffle_block.3} parent=5 // pred_region
      %s188 = ssub.s32 %s10, 1
      %s189 = smul.u32 2, %s20
      %p190 = scmp.lt.s32.totalorder %s19, 1
      %s191 = scalar_select %p190, %s19, 1
      %p192 = scmp.lt.s32.totalorder %s189, 1
      %s193 = scalar_select %p192, %s189, 1
      %s194 = smul.addr %s191, 4
      %s195 = sadd.s32 %s193, %s194
      %s196 = smul.addr %s195, 8
      %s197 = scalar_lea.vmem %s0, %s196
      %p198 = pneg %p50
      %p199 = pneg %p47
      %p200 = pneg %p71
      %p201 = pneg %p68
      %p202 = pneg %p92
      %p203 = pneg %p89
      %p204 = pneg %p113
      %p205 = pneg %p110
      %p206 = pneg %p141
      %p207 = pneg %p138
      %s208 = smul.u32 2, %s20
      %p209 = scmp.lt.s32.totalorder %s19, 1
      %s210 = scalar_select %p209, %s19, 1
      %p211 = scmp.lt.s32.totalorder %s208, 1
      %s212 = scalar_select %p211, %s208, 1
      %s213 = smul.addr %s210, 8
      %s214 = sadd.s32 %s212, %s213
      %s215 = smul.addr %s214, 4
      %s216 = scalar_lea.vmem %s4, %s215
      %s217 = smul.u32 2, %s20
      %p218 = scmp.lt.s32.totalorder %s19, 1
      %s219 = scalar_select %p218, %s19, 1
      %p220 = scmp.lt.s32.totalorder %s217, 1
      %s221 = scalar_select %p220, %s217, 1
      %s222 = smul.addr %s219, 4
      %s223 = sadd.s32 %s221, %s222
      %s224 = smul.addr %s223, 8
      %s225 = scalar_lea.vmem %s0, %s224
      %s226 = smul.u32 2, %s20
      %s227 = smul.u32 2, %s20
      %p228 = scmp.lt.s32.totalorder %s19, 1
      %s229 = scalar_select %p228, %s19, 1
      %p230 = scmp.lt.s32.totalorder %s227, 1
      %s231 = scalar_select %p230, %s227, 1
      %s232 = smul.addr %s229, 8
      %s233 = sadd.s32 %s231, %s232
      %s234 = smul.addr %s233, 4
      %s235 = scalar_lea.vmem %s4, %s234
      %s236 = smul.u32 2, %s20
      %v238 = vld [vmem:[%s225] sm:$0xff]
      %v239 = vld [vmem:[%s225 + $0x8] sm:$0xff]
      %v240 = vld [vmem:[%s225 + $0x10] sm:$0xff]
      %v241 = vld [vmem:[%s225 + $0x18] sm:$0xff]
      %v242 = vpack.c.bf16 %v240, %v238
      %v243 = vpack.c.bf16 %v241, %v239
      %v244 = vld [vmem:[%s1] sm:$0xf]
      %v245 = vld [vmem:[%s1 + $0x4] sm:$0xf]
      %v246 = vld [vmem:[%s1 + $0x8] sm:$0xf]
      %v247 = vld [vmem:[%s1 + $0xc] sm:$0xf]
      %v252 = vunpack.c.l.b16 %v244
      %v253 = vunpack.c.l.b16 %v245
      %v254 = vunpack.c.l.b16 %v246
      %v255 = vunpack.c.l.b16 %v247
      %v256 = vpack.c.b16 %v253, %v252
      %v257 = vpack.c.b16 %v255, %v254
      %vm258 = vcmask 130048
      %v260 = vsel %vm258, %v256, 0
      %v263 = vsel %vm258, %v257, 0
      %265 = vmatpush.bf16.msra.mxu0 0
      %266 = vmatpush.bf16.msra.mxu0 0
      %267 = vmatpush.bf16.msra.mxu0 0
      %268 = vmatpush.bf16.msra.mxu0 0
      %269 = vmatpush.bf16.msra.mxu0 0
      %270 = vmatpush.bf16.msra.mxu0 0
      %271 = vmatpush.bf16.msra.mxu0 0
      %272 = vmatpush.bf16.msra.mxu0 %v242
      %273 = vmatmul.bf16.gmra.mxu0 %v260
      %v274 = vpop.f32.mrf.mxu0
      %v275 = vadd.f32 0.0, %v274
      %v276 = vpop.f32.mrf.mxu0
      %v277 = vadd.f32 0.0, %v276
      %278 = vmatmul.bf16.gmra.mxu0 %v263
      %v279 = vpop.f32.mrf.mxu0
      %v280 = vadd.f32 0.0, %v279
      %v281 = vpop.f32.mrf.mxu0
      %v282 = vadd.f32 0.0, %v281
      %283 = vdwg.mxu0
      %284 = vmatpush.bf16.msra.mxu0 0
      %285 = vmatpush.bf16.msra.mxu0 0
      %286 = vmatpush.bf16.msra.mxu0 0
      %287 = vmatpush.bf16.msra.mxu0 0
      %288 = vmatpush.bf16.msra.mxu0 0
      %289 = vmatpush.bf16.msra.mxu0 0
      %290 = vmatpush.bf16.msra.mxu0 0
      %291 = vmatpush.bf16.msra.mxu0 %v243
      %292 = vmatmul.bf16.gmra.mxu0 %v260
      %v293 = vpop.f32.mrf.mxu0
      %v294 = vadd.f32 0.0, %v293
      %v295 = vpop.f32.mrf.mxu0
      %v296 = vadd.f32 0.0, %v295
      %297 = vmatmul.bf16.gmra.mxu0 %v263
      %v298 = vpop.f32.mrf.mxu0
      %v299 = vadd.f32 0.0, %v298
      %v300 = vpop.f32.mrf.mxu0
      %v301 = vadd.f32 0.0, %v300
      %302 = vdwg.mxu0
      %v303 = vld [vmem:[%s2] sm:$0xff]
      %v304 = vld [vmem:[%s2 + $0x8] sm:$0xff]
      %v305 = vld [vmem:[%s2 + $0x10] sm:$0xff]
      %v306 = vld [vmem:[%s2 + $0x18] sm:$0xff]
      %308 = vset.pattern.permute.xlu0 0
      %309 = vperm.xlu0 %308, %v303
      %v310 = vpop.permute.xlu0 %309
      %313 = vset.pattern.permute.xlu0 0
      %314 = vperm.xlu0 %313, %v304
      %v315 = vpop.permute.xlu0 %314
      %318 = vset.pattern.permute.xlu0 0
      %319 = vperm.xlu0 %318, %v305
      %v320 = vpop.permute.xlu0 %319
      %323 = vset.pattern.permute.xlu0 0
      %324 = vperm.xlu0 %323, %v306
      %v325 = vpop.permute.xlu0 %324
      %v327 = vmul.f32 %v275, %v310
      %v328 = vmul.f32 %v294, %v310
      %v329 = vmul.f32 %v277, %v315
      %v330 = vmul.f32 %v296, %v315
      %v331 = vmul.f32 %v280, %v320
      %v332 = vmul.f32 %v299, %v320
      %v333 = vmul.f32 %v282, %v325
      %v334 = vmul.f32 %v301, %v325
      %v335 = vld [vmem:[%s3] sm:$0xff]
      %v336 = vld [vmem:[%s3 + $0x8] sm:$0xff]
      %v337 = vld [vmem:[%s3 + $0x10] sm:$0xff]
      %v338 = vld [vmem:[%s3 + $0x18] sm:$0xff]
      %340 = vset.pattern.permute.xlu0 0
      %341 = vperm.xlu0 %340, %v335
      %v342 = vpop.permute.xlu0 %341
      %345 = vset.pattern.permute.xlu0 0
      %346 = vperm.xlu0 %345, %v336
      %v347 = vpop.permute.xlu0 %346
      %350 = vset.pattern.permute.xlu0 0
      %351 = vperm.xlu0 %350, %v337
      %v352 = vpop.permute.xlu0 %351
      %355 = vset.pattern.permute.xlu0 0
      %356 = vperm.xlu0 %355, %v338
      %v357 = vpop.permute.xlu0 %356
      %v359 = vadd.f32 %v327, %v342
      %v360 = vadd.f32 %v328, %v342
      %v361 = vadd.f32 %v329, %v347
      %v362 = vadd.f32 %v330, %v347
      %v363 = vadd.f32 %v331, %v352
      %v364 = vadd.f32 %v332, %v352
      %v365 = vadd.f32 %v333, %v357
      %v366 = vadd.f32 %v334, %v357
      %v367 = vadd.f32 %v359, 3.0
      %v368 = vadd.f32 %v360, 3.0
      %v369 = vadd.f32 %v361, 3.0
      %v370 = vadd.f32 %v362, 3.0
      %v371 = vadd.f32 %v363, 3.0
      %v372 = vadd.f32 %v364, 3.0
      %v373 = vadd.f32 %v365, 3.0
      %v374 = vadd.f32 %v366, 3.0
      %v375 = vmax.f32 %v367, 0.0
      %v376 = vmax.f32 %v368, 0.0
      %v377 = vmax.f32 %v369, 0.0
      %v378 = vmax.f32 %v370, 0.0
      %v379 = vmax.f32 %v371, 0.0
      %v380 = vmax.f32 %v372, 0.0
      %v381 = vmax.f32 %v373, 0.0
      %v382 = vmax.f32 %v374, 0.0
      %v383 = vmin.f32 %v375, 6.0
      %v384 = vmin.f32 %v376, 6.0
      %v385 = vmin.f32 %v377, 6.0
      %v386 = vmin.f32 %v378, 6.0
      %v387 = vmin.f32 %v379, 6.0
      %v388 = vmin.f32 %v380, 6.0
      %v389 = vmin.f32 %v381, 6.0
      %v390 = vmin.f32 %v382, 6.0
      %v391 = vmul.f32 %v359, %v383
      %v392 = vmul.f32 %v360, %v384
      %v393 = vmul.f32 %v361, %v385
      %v394 = vmul.f32 %v362, %v386
      %v395 = vmul.f32 %v363, %v387
      %v396 = vmul.f32 %v364, %v388
      %v397 = vmul.f32 %v365, %v389
      %v398 = vmul.f32 %v366, %v390
      %v399 = vmul.f32 %v391, 0.16666667
      %v400 = vmul.f32 %v392, 0.16666667
      %v401 = vmul.f32 %v393, 0.16666667
      %v402 = vmul.f32 %v394, 0.16666667
      %v403 = vmul.f32 %v395, 0.16666667
      %v404 = vmul.f32 %v396, 0.16666667
      %v405 = vmul.f32 %v397, 0.16666667
      %v406 = vmul.f32 %v398, 0.16666667
      %v407 = vpack.c.bf16 %v400, %v399
      %v408 = vpack.c.bf16 %v402, %v401
      %v409 = vpack.c.bf16 %v404, %v403
      %v410 = vpack.c.bf16 %v406, %v405
      %411 = vst [vmem:[%s235] sm:$0xff] %v407
      %412 = vst [vmem:[%s235 + $0x8] sm:$0xff] %v408
      %413 = vst [vmem:[%s235 + $0x10] sm:$0xff] %v409
      %414 = vst [vmem:[%s235 + $0x18] sm:$0xff] %v410
      %s415 = smul.u32 2, %s20
      %p416 = scmp.lt.s32.totalorder %s19, 1
      %s417 = scalar_select %p416, %s19, 1
      %p418 = scmp.lt.s32.totalorder %s415, 1
      %s419 = scalar_select %p418, %s415, 1
      %s420 = smul.addr %s417, 8
      %s421 = sadd.s32 %s419, %s420
      %s422 = smul.addr %s421, 4
      %s423 = scalar_lea.vmem %s4, %s422
      // Predicated region
      $region37: #{pixel_shuffle_block.3} parent=35 // pred_check
        %p424 = pneg %p138
      $region38: #{pixel_shuffle_block.3} parent=35 // pred_check_branch
        %426 = sbr.rel (%p424) target = $region40
      $region39: #{pixel_shuffle_block.3} parent=35 // pred_region
        %s427 = smul.u32 2, %s20
      $region40: #{pixel_shuffle_block.3} parent=35 // pred_fallthru
        _
    $region36: #{pixel_shuffle_block.3} parent=5 // pred_fallthru
      _
    %p428 = scmp.le.s32.totalorder 2, %s10
    // Predicated region
    $region41: #{pixel_shuffle_block.3} parent=5 // pred_check
      %p429 = pneg %p428
    $region42: #{pixel_shuffle_block.3} parent=5 // pred_check_branch
      %431 = sbr.rel (%p429) target = $region44
    $region43: #{pixel_shuffle_block.3} parent=5 // pred_region
      %s432 = ssub.s32 %s10, 2
      // Predicated region
      $region45: #{pixel_shuffle_block.3} parent=43 // pred_check
        %p433 = pneg %p144
      $region46: #{pixel_shuffle_block.3} parent=43 // pred_check_branch
        %435 = sbr.rel (%p433) target = $region48
      $region47: #{pixel_shuffle_block.3} parent=43 // pred_region
        %s436 = smul.u32 2, %s22
        %p437 = scmp.lt.s32.totalorder %s21, 1
        %s438 = scalar_select %p437, %s21, 1
        %p439 = scmp.lt.s32.totalorder %s436, 1
        %s440 = scalar_select %p439, %s436, 1
        %s441 = smul.addr %s438, 8
        %s442 = sadd.s32 %s440, %s441
        %s443 = smul.addr %s442, 4
        %s444 = scalar_lea.vmem %s4, %s443
      $region48: #{pixel_shuffle_block.3} parent=43 // pred_fallthru
        _
    $region44: #{pixel_shuffle_block.3} parent=5 // pred_fallthru
      _
  $region6: #{pixel_shuffle_block.3} parent=0 // loop_footer
    %s14 = sadd.s32 1, %s10
  $region7: #{pixel_shuffle_block.3} parent=0 // loop_footer_branch
    %9 = sbr.rel target = $region3
  $region8: #{pixel_shuffle_block.3} parent=0 // loop_exit
    _

</llo_original>
